<compile_context>
chip_gen: v6e
topology: v6e:2x2x1
jax: 0.10.0
libtpu: 0.0.40
codegen_flags: <defaults>
</compile_context>

<pallas_src>
import jax
import jax.numpy as jnp
from jax.experimental import pallas as pl
from jax.experimental.pallas import tpu as pltpu


def _round_up(x: int, m: int) -> int:
    return (x + m - 1) // m * m


def _foreach(n: int, unrolled: bool, body):
    """Run body(t) for t in [0, n): fully unrolled, or fori_loop(unroll=8)."""
    if unrolled:
        for t in range(n):
            body(t)
    else:
        def loop_body(t, carry):
            body(t)
            return carry
        jax.lax.fori_loop(0, n, loop_body, None, unroll=8)


def _make_embed_kernel(T: int, S: int, unrolled: bool):
    """Kernel gathering up to T embedding rows per grid step."""
    has_tail = (S % T) != 0

    def kernel(ids_ref, w_hbm, o_ref, sem):
        # ids_ref: (S_pad,) int32 token ids in SMEM (scalar prefetch).
        # w_hbm:   (V, Dk) table, raw HBM ref (memory_space=pl.ANY).
        # o_ref:   (T, Dk) output tile in VMEM.
        # sem:     single shared DMA semaphore (all row copies signal it).
        base = pl.program_id(0) * T
        if has_tail:
            valid = jnp.minimum(T, S - base)   # real tokens in this tile

        def guarded(t, fn):
            if has_tail:
                pl.when(t < valid)(fn)
            else:
                fn()

        def issue(t):
            def do():
                row = ids_ref[base + t]        # pre-clamped in the wrapper
                pltpu.make_async_copy(
                    w_hbm.at[pl.ds(row, 1), :],
                    o_ref.at[pl.ds(t, 1), :],
                    sem,
                ).start()
            guarded(t, do)

        def drain(t):
            def do():
                # Only the destination shape & semaphore matter for the wait;
                # every copy is exactly one (1, Dk) row, so the dummy row-0
                # source is shape-identical to every issued copy.
                pltpu.make_async_copy(
                    w_hbm.at[pl.ds(0, 1), :],
                    o_ref.at[pl.ds(t, 1), :],
                    sem,
                ).wait()
            guarded(t, do)

        _foreach(T, unrolled, issue)   # launch all row gathers
        _foreach(T, unrolled, drain)   # then wait for all of them

    return kernel


def token_embedding(token_ids: jax.Array, weight: jax.Array,
                    *, block_tokens: int = 256) -> jax.Array:
    """Equivalent of nn.Embedding.forward: out[i, :] = weight[token_ids[i], :]."""
    (S,) = token_ids.shape
    V, D = weight.shape
    orig_dtype = weight.dtype

    # Pack sub-32-bit tables into uint32 lanes: each gathered row then lands
    # as full 32-bit sublane words in the (T, Dk) tile instead of a packed
    # half-/quarter-sublane scatter (and bf16 halves HBM traffic vs f32).
    itemsize = jnp.dtype(orig_dtype).itemsize
    pack = (4 // itemsize) if itemsize < 4 else 1
    if pack > 1 and D % pack == 0:
        w_k = jax.lax.bitcast_convert_type(
            weight.reshape(V, D // pack, pack), jnp.uint32)
        D_k, out_dtype = D // pack, jnp.uint32
    else:
        w_k, D_k, out_dtype, pack = weight, D, orig_dtype, 1

    block_tokens = max(8, _round_up(block_tokens, 8))
    T = min(block_tokens, _round_up(S, 8))
    S_pad = _round_up(S, T)

    # Clamp once here (vectorized, effectively free) instead of two scalar ops
    # per row inside the serial DMA-issue loop; pad the tail with token 0.
    ids = jnp.clip(token_ids.astype(jnp.int32), 0, V - 1)
    if S_pad != S:
        ids = jnp.concatenate([ids, jnp.zeros((S_pad - S,), jnp.int32)])

    out_itemsize = jnp.dtype(out_dtype).itemsize
    tile_bytes = T * D_k * out_itemsize

    grid_spec = pltpu.PrefetchScalarGridSpec(
        num_scalar_prefetch=1,                       # token ids -> SMEM
        grid=(S_pad // T,),
        in_specs=[
            pl.BlockSpec(memory_space=pl.ANY),       # table stays in HBM
        ],
        out_specs=pl.BlockSpec((T, D_k), lambda i, ids: (i, 0)),
        scratch_shapes=[pltpu.SemaphoreType.DMA(())],  # one shared DMA sem
    )

    params = dict(dimension_semantics=("parallel",))
    # v5e's scoped-VMEM default is 16 MiB; raise it only when the
    # double-buffered output tile actually needs more (stay under v7x's 64 MiB).
    vmem_needed = 2 * tile_bytes + (2 << 20)
    if vmem_needed > (16 << 20):
        params["vmem_limit_bytes"] = min(vmem_needed, 60 << 20)

    out = pl.pallas_call(
        _make_embed_kernel(T, S, unrolled=(T <= 128)),
        out_shape=jax.ShapeDtypeStruct((S_pad, D_k), out_dtype),
        grid_spec=grid_spec,
        compiler_params=pltpu.CompilerParams(**params),
        cost_estimate=pl.CostEstimate(
            flops=0, transcendentals=0,
            bytes_accessed=2 * S_pad * D_k * out_itemsize + 4 * S_pad),
    )(ids, w_k)

    if pack > 1:
        out = jax.lax.bitcast_convert_type(out, orig_dtype).reshape(S_pad, D)
    return out[:S] if S_pad != S else out


if __name__ == "__main__":
    # Small shapes consistent with the module (real module: V=257216, D=2304).
    # SEQ=11 matches the docstring example and exercises the tail-guard path.
    VOCAB, DIM, SEQ = 512, 256, 11

    key = jax.random.PRNGKey(0)
    k_w, k_t = jax.random.split(key)

    # nn.Embedding init: N(0, 1); padding_idx=0 row is zeroed.
    weight = jax.random.normal(k_w, (VOCAB, DIM), dtype=jnp.float32)
    weight = weight.at[0].set(0.0)

    token_ids = jax.random.randint(k_t, (SEQ,), 0, VOCAB, dtype=jnp.int32)
    token_ids = token_ids.at[3].set(0)  # exercise the padding token

    # f32 table, single tail-guarded step.
    out = jax.block_until_ready(token_embedding(token_ids, weight))
    ref = weight[token_ids]
    assert out.shape == (SEQ, DIM) and out.dtype == jnp.float32, out.shape
    assert bool(jnp.allclose(out, ref)), "mismatch vs reference gather (f32)"
    assert bool(jnp.all(out[3] == 0.0)), "padding row must be zero"

    # bf16 table (uint32-packed DMA path) — gather is exact, bitwise equality.
    w_bf16 = weight.astype(jnp.bfloat16)
    out_bf16 = jax.block_until_ready(token_embedding(token_ids, w_bf16))
    assert out_bf16.dtype == jnp.bfloat16
    assert bool(jnp.all(out_bf16 == w_bf16[token_ids])), "mismatch (bf16 path)"

    # Exact multiple of the block -> multi-step grid, no tail guard.
    ids2 = jax.random.randint(jax.random.PRNGKey(1), (64,), 0, VOCAB, jnp.int32)
    out2 = jax.block_until_ready(token_embedding(ids2, weight, block_tokens=32))
    assert bool(jnp.allclose(out2, weight[ids2])), "mismatch (multi-step path)"

    # T=256 -> partially-unrolled fori_loop issue/drain path, with a tail step.
    ids3 = jax.random.randint(jax.random.PRNGKey(2), (300,), 0, VOCAB, jnp.int32)
    out3 = jax.block_until_ready(token_embedding(ids3, weight, block_tokens=256))
    assert bool(jnp.allclose(out3, weight[ids3])), "mismatch (fori_loop path)"

    print("KERNEL_OK")
</pallas_src>

<mosaic_0001>
module attributes {stable_mosaic.version = 11 : i64} {
  func.func @kernel(%arg0: i32, %arg1: memref<16xi32, #tpu.memory_space<smem>>, %arg2: memref<512x256xf32, #tpu.memory_space<any>>, %arg3: memref<16x256xf32, #tpu.memory_space<vmem>>, %arg4: memref<!tpu.dma_semaphore, #tpu.memory_space<semaphore_mem>>) attributes {dimension_semantics = [#tpu.dimension_semantics<parallel>], iteration_bounds = array<i64: 1>, scalar_prefetch = 1 : i64, scratch_operands = 1 : i64, tpu.core_type = #tpu.core_type<tc>, window_params = [{}, {transform_indices = @transform_1, window_bounds = array<i64: 16, 256>}]} {
    %c16_i32 = arith.constant 16 : i32
    %0 = arith.muli %arg0, %c16_i32 : i32
    %c11_i32 = arith.constant 11 : i32
    %1 = arith.subi %c11_i32, %0 : i32
    %c16_i32_0 = arith.constant 16 : i32
    %2 = arith.minsi %c16_i32_0, %1 : i32
    %c0_i32 = arith.constant 0 : i32
    %3 = arith.cmpi sgt, %2, %c0_i32 : i32
    %4 = arith.extui %3 : i1 to i32
    %c0_i32_1 = arith.constant 0 : i32
    %5 = arith.cmpi ne, %4, %c0_i32_1 : i32
    scf.if %5 {
      %c0_i32_50 = arith.constant 0 : i32
      %99 = arith.addi %0, %c0_i32_50 : i32
      %100 = arith.index_cast %99 : i32 to index
      %101 = memref.load %arg1[%100] : memref<16xi32, #tpu.memory_space<smem>>
      %c0_i32_51 = arith.constant 0 : i32
      %102 = tpu.memref_slice %arg2[%101, %c0_i32_51] : memref<512x256xf32, #tpu.memory_space<any>> -> memref<1x256xf32, #tpu.memory_space<any>>
      %c0_i32_52 = arith.constant 0 : i32
      %c0_i32_53 = arith.constant 0 : i32
      %103 = tpu.memref_slice %arg3[%c0_i32_52, %c0_i32_53] : memref<16x256xf32, #tpu.memory_space<vmem>> -> memref<1x256xf32, #tpu.memory_space<vmem>>
      tpu.enqueue_dma source(%102 : memref<1x256xf32, #tpu.memory_space<any>>) target(%103 : memref<1x256xf32, #tpu.memory_space<vmem>>) target_semaphore(%arg4 : memref<!tpu.dma_semaphore, #tpu.memory_space<semaphore_mem>>)
    } else {
    }
    %c1_i32 = arith.constant 1 : i32
    %6 = arith.cmpi sgt, %2, %c1_i32 : i32
    %7 = arith.extui %6 : i1 to i32
    %c0_i32_2 = arith.constant 0 : i32
    %8 = arith.cmpi ne, %7, %c0_i32_2 : i32
    scf.if %8 {
      %c1_i32_50 = arith.constant 1 : i32
      %99 = arith.addi %0, %c1_i32_50 : i32
      %100 = arith.index_cast %99 : i32 to index
      %101 = memref.load %arg1[%100] : memref<16xi32, #tpu.memory_space<smem>>
      %c0_i32_51 = arith.constant 0 : i32
      %102 = tpu.memref_slice %arg2[%101, %c0_i32_51] : memref<512x256xf32, #tpu.memory_space<any>> -> memref<1x256xf32, #tpu.memory_space<any>>
      %c1_i32_52 = arith.constant 1 : i32
      %c0_i32_53 = arith.constant 0 : i32
      %103 = tpu.memref_slice %arg3[%c1_i32_52, %c0_i32_53] : memref<16x256xf32, #tpu.memory_space<vmem>> -> memref<1x256xf32, #tpu.memory_space<vmem>>
      tpu.enqueue_dma source(%102 : memref<1x256xf32, #tpu.memory_space<any>>) target(%103 : memref<1x256xf32, #tpu.memory_space<vmem>>) target_semaphore(%arg4 : memref<!tpu.dma_semaphore, #tpu.memory_space<semaphore_mem>>)
    } else {
    }
    %c2_i32 = arith.constant 2 : i32
    %9 = arith.cmpi sgt, %2, %c2_i32 : i32
    %10 = arith.extui %9 : i1 to i32
    %c0_i32_3 = arith.constant 0 : i32
    %11 = arith.cmpi ne, %10, %c0_i32_3 : i32
    scf.if %11 {
      %c2_i32_50 = arith.constant 2 : i32
      %99 = arith.addi %0, %c2_i32_50 : i32
      %100 = arith.index_cast %99 : i32 to index
      %101 = memref.load %arg1[%100] : memref<16xi32, #tpu.memory_space<smem>>
      %c0_i32_51 = arith.constant 0 : i32
      %102 = tpu.memref_slice %arg2[%101, %c0_i32_51] : memref<512x256xf32, #tpu.memory_space<any>> -> memref<1x256xf32, #tpu.memory_space<any>>
      %c2_i32_52 = arith.constant 2 : i32
      %c0_i32_53 = arith.constant 0 : i32
      %103 = tpu.memref_slice %arg3[%c2_i32_52, %c0_i32_53] : memref<16x256xf32, #tpu.memory_space<vmem>> -> memref<1x256xf32, #tpu.memory_space<vmem>>
      tpu.enqueue_dma source(%102 : memref<1x256xf32, #tpu.memory_space<any>>) target(%103 : memref<1x256xf32, #tpu.memory_space<vmem>>) target_semaphore(%arg4 : memref<!tpu.dma_semaphore, #tpu.memory_space<semaphore_mem>>)
    } else {
    }
    %c3_i32 = arith.constant 3 : i32
    %12 = arith.cmpi sgt, %2, %c3_i32 : i32
    %13 = arith.extui %12 : i1 to i32
    %c0_i32_4 = arith.constant 0 : i32
    %14 = arith.cmpi ne, %13, %c0_i32_4 : i32
    scf.if %14 {
      %c3_i32_50 = arith.constant 3 : i32
      %99 = arith.addi %0, %c3_i32_50 : i32
      %100 = arith.index_cast %99 : i32 to index
      %101 = memref.load %arg1[%100] : memref<16xi32, #tpu.memory_space<smem>>
      %c0_i32_51 = arith.constant 0 : i32
      %102 = tpu.memref_slice %arg2[%101, %c0_i32_51] : memref<512x256xf32, #tpu.memory_space<any>> -> memref<1x256xf32, #tpu.memory_space<any>>
      %c3_i32_52 = arith.constant 3 : i32
      %c0_i32_53 = arith.constant 0 : i32
      %103 = tpu.memref_slice %arg3[%c3_i32_52, %c0_i32_53] : memref<16x256xf32, #tpu.memory_space<vmem>> -> memref<1x256xf32, #tpu.memory_space<vmem>>
      tpu.enqueue_dma source(%102 : memref<1x256xf32, #tpu.memory_space<any>>) target(%103 : memref<1x256xf32, #tpu.memory_space<vmem>>) target_semaphore(%arg4 : memref<!tpu.dma_semaphore, #tpu.memory_space<semaphore_mem>>)
    } else {
    }
    %c4_i32 = arith.constant 4 : i32
    %15 = arith.cmpi sgt, %2, %c4_i32 : i32
    %16 = arith.extui %15 : i1 to i32
    %c0_i32_5 = arith.constant 0 : i32
    %17 = arith.cmpi ne, %16, %c0_i32_5 : i32
    scf.if %17 {
      %c4_i32_50 = arith.constant 4 : i32
      %99 = arith.addi %0, %c4_i32_50 : i32
      %100 = arith.index_cast %99 : i32 to index
      %101 = memref.load %arg1[%100] : memref<16xi32, #tpu.memory_space<smem>>
      %c0_i32_51 = arith.constant 0 : i32
      %102 = tpu.memref_slice %arg2[%101, %c0_i32_51] : memref<512x256xf32, #tpu.memory_space<any>> -> memref<1x256xf32, #tpu.memory_space<any>>
      %c4_i32_52 = arith.constant 4 : i32
      %c0_i32_53 = arith.constant 0 : i32
      %103 = tpu.memref_slice %arg3[%c4_i32_52, %c0_i32_53] : memref<16x256xf32, #tpu.memory_space<vmem>> -> memref<1x256xf32, #tpu.memory_space<vmem>>
      tpu.enqueue_dma source(%102 : memref<1x256xf32, #tpu.memory_space<any>>) target(%103 : memref<1x256xf32, #tpu.memory_space<vmem>>) target_semaphore(%arg4 : memref<!tpu.dma_semaphore, #tpu.memory_space<semaphore_mem>>)
    } else {
    }
    %c5_i32 = arith.constant 5 : i32
    %18 = arith.cmpi sgt, %2, %c5_i32 : i32
    %19 = arith.extui %18 : i1 to i32
    %c0_i32_6 = arith.constant 0 : i32
    %20 = arith.cmpi ne, %19, %c0_i32_6 : i32
    scf.if %20 {
      %c5_i32_50 = arith.constant 5 : i32
      %99 = arith.addi %0, %c5_i32_50 : i32
      %100 = arith.index_cast %99 : i32 to index
      %101 = memref.load %arg1[%100] : memref<16xi32, #tpu.memory_space<smem>>
      %c0_i32_51 = arith.constant 0 : i32
      %102 = tpu.memref_slice %arg2[%101, %c0_i32_51] : memref<512x256xf32, #tpu.memory_space<any>> -> memref<1x256xf32, #tpu.memory_space<any>>
      %c5_i32_52 = arith.constant 5 : i32
      %c0_i32_53 = arith.constant 0 : i32
      %103 = tpu.memref_slice %arg3[%c5_i32_52, %c0_i32_53] : memref<16x256xf32, #tpu.memory_space<vmem>> -> memref<1x256xf32, #tpu.memory_space<vmem>>
      tpu.enqueue_dma source(%102 : memref<1x256xf32, #tpu.memory_space<any>>) target(%103 : memref<1x256xf32, #tpu.memory_space<vmem>>) target_semaphore(%arg4 : memref<!tpu.dma_semaphore, #tpu.memory_space<semaphore_mem>>)
    } else {
    }
    %c6_i32 = arith.constant 6 : i32
    %21 = arith.cmpi sgt, %2, %c6_i32 : i32
    %22 = arith.extui %21 : i1 to i32
    %c0_i32_7 = arith.constant 0 : i32
    %23 = arith.cmpi ne, %22, %c0_i32_7 : i32
    scf.if %23 {
      %c6_i32_50 = arith.constant 6 : i32
      %99 = arith.addi %0, %c6_i32_50 : i32
      %100 = arith.index_cast %99 : i32 to index
      %101 = memref.load %arg1[%100] : memref<16xi32, #tpu.memory_space<smem>>
      %c0_i32_51 = arith.constant 0 : i32
      %102 = tpu.memref_slice %arg2[%101, %c0_i32_51] : memref<512x256xf32, #tpu.memory_space<any>> -> memref<1x256xf32, #tpu.memory_space<any>>
      %c6_i32_52 = arith.constant 6 : i32
      %c0_i32_53 = arith.constant 0 : i32
      %103 = tpu.memref_slice %arg3[%c6_i32_52, %c0_i32_53] : memref<16x256xf32, #tpu.memory_space<vmem>> -> memref<1x256xf32, #tpu.memory_space<vmem>>
      tpu.enqueue_dma source(%102 : memref<1x256xf32, #tpu.memory_space<any>>) target(%103 : memref<1x256xf32, #tpu.memory_space<vmem>>) target_semaphore(%arg4 : memref<!tpu.dma_semaphore, #tpu.memory_space<semaphore_mem>>)
    } else {
    }
    %c7_i32 = arith.constant 7 : i32
    %24 = arith.cmpi sgt, %2, %c7_i32 : i32
    %25 = arith.extui %24 : i1 to i32
    %c0_i32_8 = arith.constant 0 : i32
    %26 = arith.cmpi ne, %25, %c0_i32_8 : i32
    scf.if %26 {
      %c7_i32_50 = arith.constant 7 : i32
      %99 = arith.addi %0, %c7_i32_50 : i32
      %100 = arith.index_cast %99 : i32 to index
      %101 = memref.load %arg1[%100] : memref<16xi32, #tpu.memory_space<smem>>
      %c0_i32_51 = arith.constant 0 : i32
      %102 = tpu.memref_slice %arg2[%101, %c0_i32_51] : memref<512x256xf32, #tpu.memory_space<any>> -> memref<1x256xf32, #tpu.memory_space<any>>
      %c7_i32_52 = arith.constant 7 : i32
      %c0_i32_53 = arith.constant 0 : i32
      %103 = tpu.memref_slice %arg3[%c7_i32_52, %c0_i32_53] : memref<16x256xf32, #tpu.memory_space<vmem>> -> memref<1x256xf32, #tpu.memory_space<vmem>>
      tpu.enqueue_dma source(%102 : memref<1x256xf32, #tpu.memory_space<any>>) target(%103 : memref<1x256xf32, #tpu.memory_space<vmem>>) target_semaphore(%arg4 : memref<!tpu.dma_semaphore, #tpu.memory_space<semaphore_mem>>)
    } else {
    }
    %c8_i32 = arith.constant 8 : i32
    %27 = arith.cmpi sgt, %2, %c8_i32 : i32
    %28 = arith.extui %27 : i1 to i32
    %c0_i32_9 = arith.constant 0 : i32
    %29 = arith.cmpi ne, %28, %c0_i32_9 : i32
    scf.if %29 {
      %c8_i32_50 = arith.constant 8 : i32
      %99 = arith.addi %0, %c8_i32_50 : i32
      %100 = arith.index_cast %99 : i32 to index
      %101 = memref.load %arg1[%100] : memref<16xi32, #tpu.memory_space<smem>>
      %c0_i32_51 = arith.constant 0 : i32
      %102 = tpu.memref_slice %arg2[%101, %c0_i32_51] : memref<512x256xf32, #tpu.memory_space<any>> -> memref<1x256xf32, #tpu.memory_space<any>>
      %c8_i32_52 = arith.constant 8 : i32
      %c0_i32_53 = arith.constant 0 : i32
      %103 = tpu.memref_slice %arg3[%c8_i32_52, %c0_i32_53] : memref<16x256xf32, #tpu.memory_space<vmem>> -> memref<1x256xf32, #tpu.memory_space<vmem>>
      tpu.enqueue_dma source(%102 : memref<1x256xf32, #tpu.memory_space<any>>) target(%103 : memref<1x256xf32, #tpu.memory_space<vmem>>) target_semaphore(%arg4 : memref<!tpu.dma_semaphore, #tpu.memory_space<semaphore_mem>>)
    } else {
    }
    %c9_i32 = arith.constant 9 : i32
    %30 = arith.cmpi sgt, %2, %c9_i32 : i32
    %31 = arith.extui %30 : i1 to i32
    %c0_i32_10 = arith.constant 0 : i32
    %32 = arith.cmpi ne, %31, %c0_i32_10 : i32
    scf.if %32 {
      %c9_i32_50 = arith.constant 9 : i32
      %99 = arith.addi %0, %c9_i32_50 : i32
      %100 = arith.index_cast %99 : i32 to index
      %101 = memref.load %arg1[%100] : memref<16xi32, #tpu.memory_space<smem>>
      %c0_i32_51 = arith.constant 0 : i32
      %102 = tpu.memref_slice %arg2[%101, %c0_i32_51] : memref<512x256xf32, #tpu.memory_space<any>> -> memref<1x256xf32, #tpu.memory_space<any>>
      %c9_i32_52 = arith.constant 9 : i32
      %c0_i32_53 = arith.constant 0 : i32
      %103 = tpu.memref_slice %arg3[%c9_i32_52, %c0_i32_53] : memref<16x256xf32, #tpu.memory_space<vmem>> -> memref<1x256xf32, #tpu.memory_space<vmem>>
      tpu.enqueue_dma source(%102 : memref<1x256xf32, #tpu.memory_space<any>>) target(%103 : memref<1x256xf32, #tpu.memory_space<vmem>>) target_semaphore(%arg4 : memref<!tpu.dma_semaphore, #tpu.memory_space<semaphore_mem>>)
    } else {
    }
    %c10_i32 = arith.constant 10 : i32
    %33 = arith.cmpi sgt, %2, %c10_i32 : i32
    %34 = arith.extui %33 : i1 to i32
    %c0_i32_11 = arith.constant 0 : i32
    %35 = arith.cmpi ne, %34, %c0_i32_11 : i32
    scf.if %35 {
      %c10_i32_50 = arith.constant 10 : i32
      %99 = arith.addi %0, %c10_i32_50 : i32
      %100 = arith.index_cast %99 : i32 to index
      %101 = memref.load %arg1[%100] : memref<16xi32, #tpu.memory_space<smem>>
      %c0_i32_51 = arith.constant 0 : i32
      %102 = tpu.memref_slice %arg2[%101, %c0_i32_51] : memref<512x256xf32, #tpu.memory_space<any>> -> memref<1x256xf32, #tpu.memory_space<any>>
      %c10_i32_52 = arith.constant 10 : i32
      %c0_i32_53 = arith.constant 0 : i32
      %103 = tpu.memref_slice %arg3[%c10_i32_52, %c0_i32_53] : memref<16x256xf32, #tpu.memory_space<vmem>> -> memref<1x256xf32, #tpu.memory_space<vmem>>
      tpu.enqueue_dma source(%102 : memref<1x256xf32, #tpu.memory_space<any>>) target(%103 : memref<1x256xf32, #tpu.memory_space<vmem>>) target_semaphore(%arg4 : memref<!tpu.dma_semaphore, #tpu.memory_space<semaphore_mem>>)
    } else {
    }
    %c11_i32_12 = arith.constant 11 : i32
    %36 = arith.cmpi sgt, %2, %c11_i32_12 : i32
    %37 = arith.extui %36 : i1 to i32
    %c0_i32_13 = arith.constant 0 : i32
    %38 = arith.cmpi ne, %37, %c0_i32_13 : i32
    scf.if %38 {
      %c11_i32_50 = arith.constant 11 : i32
      %99 = arith.addi %0, %c11_i32_50 : i32
      %100 = arith.index_cast %99 : i32 to index
      %101 = memref.load %arg1[%100] : memref<16xi32, #tpu.memory_space<smem>>
      %c0_i32_51 = arith.constant 0 : i32
      %102 = tpu.memref_slice %arg2[%101, %c0_i32_51] : memref<512x256xf32, #tpu.memory_space<any>> -> memref<1x256xf32, #tpu.memory_space<any>>
      %c11_i32_52 = arith.constant 11 : i32
      %c0_i32_53 = arith.constant 0 : i32
      %103 = tpu.memref_slice %arg3[%c11_i32_52, %c0_i32_53] : memref<16x256xf32, #tpu.memory_space<vmem>> -> memref<1x256xf32, #tpu.memory_space<vmem>>
      tpu.enqueue_dma source(%102 : memref<1x256xf32, #tpu.memory_space<any>>) target(%103 : memref<1x256xf32, #tpu.memory_space<vmem>>) target_semaphore(%arg4 : memref<!tpu.dma_semaphore, #tpu.memory_space<semaphore_mem>>)
    } else {
    }
    %c12_i32 = arith.constant 12 : i32
    %39 = arith.cmpi sgt, %2, %c12_i32 : i32
    %40 = arith.extui %39 : i1 to i32
    %c0_i32_14 = arith.constant 0 : i32
    %41 = arith.cmpi ne, %40, %c0_i32_14 : i32
    scf.if %41 {
      %c12_i32_50 = arith.constant 12 : i32
      %99 = arith.addi %0, %c12_i32_50 : i32
      %100 = arith.index_cast %99 : i32 to index
      %101 = memref.load %arg1[%100] : memref<16xi32, #tpu.memory_space<smem>>
      %c0_i32_51 = arith.constant 0 : i32
      %102 = tpu.memref_slice %arg2[%101, %c0_i32_51] : memref<512x256xf32, #tpu.memory_space<any>> -> memref<1x256xf32, #tpu.memory_space<any>>
      %c12_i32_52 = arith.constant 12 : i32
      %c0_i32_53 = arith.constant 0 : i32
      %103 = tpu.memref_slice %arg3[%c12_i32_52, %c0_i32_53] : memref<16x256xf32, #tpu.memory_space<vmem>> -> memref<1x256xf32, #tpu.memory_space<vmem>>
      tpu.enqueue_dma source(%102 : memref<1x256xf32, #tpu.memory_space<any>>) target(%103 : memref<1x256xf32, #tpu.memory_space<vmem>>) target_semaphore(%arg4 : memref<!tpu.dma_semaphore, #tpu.memory_space<semaphore_mem>>)
    } else {
    }
    %c13_i32 = arith.constant 13 : i32
    %42 = arith.cmpi sgt, %2, %c13_i32 : i32
    %43 = arith.extui %42 : i1 to i32
    %c0_i32_15 = arith.constant 0 : i32
    %44 = arith.cmpi ne, %43, %c0_i32_15 : i32
    scf.if %44 {
      %c13_i32_50 = arith.constant 13 : i32
      %99 = arith.addi %0, %c13_i32_50 : i32
      %100 = arith.index_cast %99 : i32 to index
      %101 = memref.load %arg1[%100] : memref<16xi32, #tpu.memory_space<smem>>
      %c0_i32_51 = arith.constant 0 : i32
      %102 = tpu.memref_slice %arg2[%101, %c0_i32_51] : memref<512x256xf32, #tpu.memory_space<any>> -> memref<1x256xf32, #tpu.memory_space<any>>
      %c13_i32_52 = arith.constant 13 : i32
      %c0_i32_53 = arith.constant 0 : i32
      %103 = tpu.memref_slice %arg3[%c13_i32_52, %c0_i32_53] : memref<16x256xf32, #tpu.memory_space<vmem>> -> memref<1x256xf32, #tpu.memory_space<vmem>>
      tpu.enqueue_dma source(%102 : memref<1x256xf32, #tpu.memory_space<any>>) target(%103 : memref<1x256xf32, #tpu.memory_space<vmem>>) target_semaphore(%arg4 : memref<!tpu.dma_semaphore, #tpu.memory_space<semaphore_mem>>)
    } else {
    }
    %c14_i32 = arith.constant 14 : i32
    %45 = arith.cmpi sgt, %2, %c14_i32 : i32
    %46 = arith.extui %45 : i1 to i32
    %c0_i32_16 = arith.constant 0 : i32
    %47 = arith.cmpi ne, %46, %c0_i32_16 : i32
    scf.if %47 {
      %c14_i32_50 = arith.constant 14 : i32
      %99 = arith.addi %0, %c14_i32_50 : i32
      %100 = arith.index_cast %99 : i32 to index
      %101 = memref.load %arg1[%100] : memref<16xi32, #tpu.memory_space<smem>>
      %c0_i32_51 = arith.constant 0 : i32
      %102 = tpu.memref_slice %arg2[%101, %c0_i32_51] : memref<512x256xf32, #tpu.memory_space<any>> -> memref<1x256xf32, #tpu.memory_space<any>>
      %c14_i32_52 = arith.constant 14 : i32
      %c0_i32_53 = arith.constant 0 : i32
      %103 = tpu.memref_slice %arg3[%c14_i32_52, %c0_i32_53] : memref<16x256xf32, #tpu.memory_space<vmem>> -> memref<1x256xf32, #tpu.memory_space<vmem>>
      tpu.enqueue_dma source(%102 : memref<1x256xf32, #tpu.memory_space<any>>) target(%103 : memref<1x256xf32, #tpu.memory_space<vmem>>) target_semaphore(%arg4 : memref<!tpu.dma_semaphore, #tpu.memory_space<semaphore_mem>>)
    } else {
    }
    %c15_i32 = arith.constant 15 : i32
    %48 = arith.cmpi sgt, %2, %c15_i32 : i32
    %49 = arith.extui %48 : i1 to i32
    %c0_i32_17 = arith.constant 0 : i32
    %50 = arith.cmpi ne, %49, %c0_i32_17 : i32
    scf.if %50 {
      %c15_i32_50 = arith.constant 15 : i32
      %99 = arith.addi %0, %c15_i32_50 : i32
      %100 = arith.index_cast %99 : i32 to index
      %101 = memref.load %arg1[%100] : memref<16xi32, #tpu.memory_space<smem>>
      %c0_i32_51 = arith.constant 0 : i32
      %102 = tpu.memref_slice %arg2[%101, %c0_i32_51] : memref<512x256xf32, #tpu.memory_space<any>> -> memref<1x256xf32, #tpu.memory_space<any>>
      %c15_i32_52 = arith.constant 15 : i32
      %c0_i32_53 = arith.constant 0 : i32
      %103 = tpu.memref_slice %arg3[%c15_i32_52, %c0_i32_53] : memref<16x256xf32, #tpu.memory_space<vmem>> -> memref<1x256xf32, #tpu.memory_space<vmem>>
      tpu.enqueue_dma source(%102 : memref<1x256xf32, #tpu.memory_space<any>>) target(%103 : memref<1x256xf32, #tpu.memory_space<vmem>>) target_semaphore(%arg4 : memref<!tpu.dma_semaphore, #tpu.memory_space<semaphore_mem>>)
    } else {
    }
    %c0_i32_18 = arith.constant 0 : i32
    %51 = arith.cmpi sgt, %2, %c0_i32_18 : i32
    %52 = arith.extui %51 : i1 to i32
    %c0_i32_19 = arith.constant 0 : i32
    %53 = arith.cmpi ne, %52, %c0_i32_19 : i32
    scf.if %53 {
      %c0_i32_50 = arith.constant 0 : i32
      %c0_i32_51 = arith.constant 0 : i32
      %99 = tpu.memref_slice %arg2[%c0_i32_50, %c0_i32_51] : memref<512x256xf32, #tpu.memory_space<any>> -> memref<1x256xf32, #tpu.memory_space<any>>
      %c0_i32_52 = arith.constant 0 : i32
      %c0_i32_53 = arith.constant 0 : i32
      %100 = tpu.memref_slice %arg3[%c0_i32_52, %c0_i32_53] : memref<16x256xf32, #tpu.memory_space<vmem>> -> memref<1x256xf32, #tpu.memory_space<vmem>>
      tpu.wait_dma2 semaphore(%arg4 : memref<!tpu.dma_semaphore, #tpu.memory_space<semaphore_mem>>) src(%99 : memref<1x256xf32, #tpu.memory_space<any>>) dst(%100 : memref<1x256xf32, #tpu.memory_space<vmem>>)
    } else {
    }
    %c1_i32_20 = arith.constant 1 : i32
    %54 = arith.cmpi sgt, %2, %c1_i32_20 : i32
    %55 = arith.extui %54 : i1 to i32
    %c0_i32_21 = arith.constant 0 : i32
    %56 = arith.cmpi ne, %55, %c0_i32_21 : i32
    scf.if %56 {
      %c0_i32_50 = arith.constant 0 : i32
      %c0_i32_51 = arith.constant 0 : i32
      %99 = tpu.memref_slice %arg2[%c0_i32_50, %c0_i32_51] : memref<512x256xf32, #tpu.memory_space<any>> -> memref<1x256xf32, #tpu.memory_space<any>>
      %c1_i32_52 = arith.constant 1 : i32
      %c0_i32_53 = arith.constant 0 : i32
      %100 = tpu.memref_slice %arg3[%c1_i32_52, %c0_i32_53] : memref<16x256xf32, #tpu.memory_space<vmem>> -> memref<1x256xf32, #tpu.memory_space<vmem>>
      tpu.wait_dma2 semaphore(%arg4 : memref<!tpu.dma_semaphore, #tpu.memory_space<semaphore_mem>>) src(%99 : memref<1x256xf32, #tpu.memory_space<any>>) dst(%100 : memref<1x256xf32, #tpu.memory_space<vmem>>)
    } else {
    }
    %c2_i32_22 = arith.constant 2 : i32
    %57 = arith.cmpi sgt, %2, %c2_i32_22 : i32
    %58 = arith.extui %57 : i1 to i32
    %c0_i32_23 = arith.constant 0 : i32
    %59 = arith.cmpi ne, %58, %c0_i32_23 : i32
    scf.if %59 {
      %c0_i32_50 = arith.constant 0 : i32
      %c0_i32_51 = arith.constant 0 : i32
      %99 = tpu.memref_slice %arg2[%c0_i32_50, %c0_i32_51] : memref<512x256xf32, #tpu.memory_space<any>> -> memref<1x256xf32, #tpu.memory_space<any>>
      %c2_i32_52 = arith.constant 2 : i32
      %c0_i32_53 = arith.constant 0 : i32
      %100 = tpu.memref_slice %arg3[%c2_i32_52, %c0_i32_53] : memref<16x256xf32, #tpu.memory_space<vmem>> -> memref<1x256xf32, #tpu.memory_space<vmem>>
      tpu.wait_dma2 semaphore(%arg4 : memref<!tpu.dma_semaphore, #tpu.memory_space<semaphore_mem>>) src(%99 : memref<1x256xf32, #tpu.memory_space<any>>) dst(%100 : memref<1x256xf32, #tpu.memory_space<vmem>>)
    } else {
    }
    %c3_i32_24 = arith.constant 3 : i32
    %60 = arith.cmpi sgt, %2, %c3_i32_24 : i32
    %61 = arith.extui %60 : i1 to i32
    %c0_i32_25 = arith.constant 0 : i32
    %62 = arith.cmpi ne, %61, %c0_i32_25 : i32
    scf.if %62 {
      %c0_i32_50 = arith.constant 0 : i32
      %c0_i32_51 = arith.constant 0 : i32
      %99 = tpu.memref_slice %arg2[%c0_i32_50, %c0_i32_51] : memref<512x256xf32, #tpu.memory_space<any>> -> memref<1x256xf32, #tpu.memory_space<any>>
      %c3_i32_52 = arith.constant 3 : i32
      %c0_i32_53 = arith.constant 0 : i32
      %100 = tpu.memref_slice %arg3[%c3_i32_52, %c0_i32_53] : memref<16x256xf32, #tpu.memory_space<vmem>> -> memref<1x256xf32, #tpu.memory_space<vmem>>
      tpu.wait_dma2 semaphore(%arg4 : memref<!tpu.dma_semaphore, #tpu.memory_space<semaphore_mem>>) src(%99 : memref<1x256xf32, #tpu.memory_space<any>>) dst(%100 : memref<1x256xf32, #tpu.memory_space<vmem>>)
    } else {
    }
    %c4_i32_26 = arith.constant 4 : i32
    %63 = arith.cmpi sgt, %2, %c4_i32_26 : i32
    %64 = arith.extui %63 : i1 to i32
    %c0_i32_27 = arith.constant 0 : i32
    %65 = arith.cmpi ne, %64, %c0_i32_27 : i32
    scf.if %65 {
      %c0_i32_50 = arith.constant 0 : i32
      %c0_i32_51 = arith.constant 0 : i32
      %99 = tpu.memref_slice %arg2[%c0_i32_50, %c0_i32_51] : memref<512x256xf32, #tpu.memory_space<any>> -> memref<1x256xf32, #tpu.memory_space<any>>
      %c4_i32_52 = arith.constant 4 : i32
      %c0_i32_53 = arith.constant 0 : i32
      %100 = tpu.memref_slice %arg3[%c4_i32_52, %c0_i32_53] : memref<16x256xf32, #tpu.memory_space<vmem>> -> memref<1x256xf32, #tpu.memory_space<vmem>>
      tpu.wait_dma2 semaphore(%arg4 : memref<!tpu.dma_semaphore, #tpu.memory_space<semaphore_mem>>) src(%99 : memref<1x256xf32, #tpu.memory_space<any>>) dst(%100 : memref<1x256xf32, #tpu.memory_space<vmem>>)
    } else {
    }
    %c5_i32_28 = arith.constant 5 : i32
    %66 = arith.cmpi sgt, %2, %c5_i32_28 : i32
    %67 = arith.extui %66 : i1 to i32
    %c0_i32_29 = arith.constant 0 : i32
    %68 = arith.cmpi ne, %67, %c0_i32_29 : i32
    scf.if %68 {
      %c0_i32_50 = arith.constant 0 : i32
      %c0_i32_51 = arith.constant 0 : i32
      %99 = tpu.memref_slice %arg2[%c0_i32_50, %c0_i32_51] : memref<512x256xf32, #tpu.memory_space<any>> -> memref<1x256xf32, #tpu.memory_space<any>>
      %c5_i32_52 = arith.constant 5 : i32
      %c0_i32_53 = arith.constant 0 : i32
      %100 = tpu.memref_slice %arg3[%c5_i32_52, %c0_i32_53] : memref<16x256xf32, #tpu.memory_space<vmem>> -> memref<1x256xf32, #tpu.memory_space<vmem>>
      tpu.wait_dma2 semaphore(%arg4 : memref<!tpu.dma_semaphore, #tpu.memory_space<semaphore_mem>>) src(%99 : memref<1x256xf32, #tpu.memory_space<any>>) dst(%100 : memref<1x256xf32, #tpu.memory_space<vmem>>)
    } else {
    }
    %c6_i32_30 = arith.constant 6 : i32
    %69 = arith.cmpi sgt, %2, %c6_i32_30 : i32
    %70 = arith.extui %69 : i1 to i32
    %c0_i32_31 = arith.constant 0 : i32
    %71 = arith.cmpi ne, %70, %c0_i32_31 : i32
    scf.if %71 {
      %c0_i32_50 = arith.constant 0 : i32
      %c0_i32_51 = arith.constant 0 : i32
      %99 = tpu.memref_slice %arg2[%c0_i32_50, %c0_i32_51] : memref<512x256xf32, #tpu.memory_space<any>> -> memref<1x256xf32, #tpu.memory_space<any>>
      %c6_i32_52 = arith.constant 6 : i32
      %c0_i32_53 = arith.constant 0 : i32
      %100 = tpu.memref_slice %arg3[%c6_i32_52, %c0_i32_53] : memref<16x256xf32, #tpu.memory_space<vmem>> -> memref<1x256xf32, #tpu.memory_space<vmem>>
      tpu.wait_dma2 semaphore(%arg4 : memref<!tpu.dma_semaphore, #tpu.memory_space<semaphore_mem>>) src(%99 : memref<1x256xf32, #tpu.memory_space<any>>) dst(%100 : memref<1x256xf32, #tpu.memory_space<vmem>>)
    } else {
    }
    %c7_i32_32 = arith.constant 7 : i32
    %72 = arith.cmpi sgt, %2, %c7_i32_32 : i32
    %73 = arith.extui %72 : i1 to i32
    %c0_i32_33 = arith.constant 0 : i32
    %74 = arith.cmpi ne, %73, %c0_i32_33 : i32
    scf.if %74 {
      %c0_i32_50 = arith.constant 0 : i32
      %c0_i32_51 = arith.constant 0 : i32
      %99 = tpu.memref_slice %arg2[%c0_i32_50, %c0_i32_51] : memref<512x256xf32, #tpu.memory_space<any>> -> memref<1x256xf32, #tpu.memory_space<any>>
      %c7_i32_52 = arith.constant 7 : i32
      %c0_i32_53 = arith.constant 0 : i32
      %100 = tpu.memref_slice %arg3[%c7_i32_52, %c0_i32_53] : memref<16x256xf32, #tpu.memory_space<vmem>> -> memref<1x256xf32, #tpu.memory_space<vmem>>
      tpu.wait_dma2 semaphore(%arg4 : memref<!tpu.dma_semaphore, #tpu.memory_space<semaphore_mem>>) src(%99 : memref<1x256xf32, #tpu.memory_space<any>>) dst(%100 : memref<1x256xf32, #tpu.memory_space<vmem>>)
    } else {
    }
    %c8_i32_34 = arith.constant 8 : i32
    %75 = arith.cmpi sgt, %2, %c8_i32_34 : i32
    %76 = arith.extui %75 : i1 to i32
    %c0_i32_35 = arith.constant 0 : i32
    %77 = arith.cmpi ne, %76, %c0_i32_35 : i32
    scf.if %77 {
      %c0_i32_50 = arith.constant 0 : i32
      %c0_i32_51 = arith.constant 0 : i32
      %99 = tpu.memref_slice %arg2[%c0_i32_50, %c0_i32_51] : memref<512x256xf32, #tpu.memory_space<any>> -> memref<1x256xf32, #tpu.memory_space<any>>
      %c8_i32_52 = arith.constant 8 : i32
      %c0_i32_53 = arith.constant 0 : i32
      %100 = tpu.memref_slice %arg3[%c8_i32_52, %c0_i32_53] : memref<16x256xf32, #tpu.memory_space<vmem>> -> memref<1x256xf32, #tpu.memory_space<vmem>>
      tpu.wait_dma2 semaphore(%arg4 : memref<!tpu.dma_semaphore, #tpu.memory_space<semaphore_mem>>) src(%99 : memref<1x256xf32, #tpu.memory_space<any>>) dst(%100 : memref<1x256xf32, #tpu.memory_space<vmem>>)
    } else {
    }
    %c9_i32_36 = arith.constant 9 : i32
    %78 = arith.cmpi sgt, %2, %c9_i32_36 : i32
    %79 = arith.extui %78 : i1 to i32
    %c0_i32_37 = arith.constant 0 : i32
    %80 = arith.cmpi ne, %79, %c0_i32_37 : i32
    scf.if %80 {
      %c0_i32_50 = arith.constant 0 : i32
      %c0_i32_51 = arith.constant 0 : i32
      %99 = tpu.memref_slice %arg2[%c0_i32_50, %c0_i32_51] : memref<512x256xf32, #tpu.memory_space<any>> -> memref<1x256xf32, #tpu.memory_space<any>>
      %c9_i32_52 = arith.constant 9 : i32
      %c0_i32_53 = arith.constant 0 : i32
      %100 = tpu.memref_slice %arg3[%c9_i32_52, %c0_i32_53] : memref<16x256xf32, #tpu.memory_space<vmem>> -> memref<1x256xf32, #tpu.memory_space<vmem>>
      tpu.wait_dma2 semaphore(%arg4 : memref<!tpu.dma_semaphore, #tpu.memory_space<semaphore_mem>>) src(%99 : memref<1x256xf32, #tpu.memory_space<any>>) dst(%100 : memref<1x256xf32, #tpu.memory_space<vmem>>)
    } else {
    }
    %c10_i32_38 = arith.constant 10 : i32
    %81 = arith.cmpi sgt, %2, %c10_i32_38 : i32
    %82 = arith.extui %81 : i1 to i32
    %c0_i32_39 = arith.constant 0 : i32
    %83 = arith.cmpi ne, %82, %c0_i32_39 : i32
    scf.if %83 {
      %c0_i32_50 = arith.constant 0 : i32
      %c0_i32_51 = arith.constant 0 : i32
      %99 = tpu.memref_slice %arg2[%c0_i32_50, %c0_i32_51] : memref<512x256xf32, #tpu.memory_space<any>> -> memref<1x256xf32, #tpu.memory_space<any>>
      %c10_i32_52 = arith.constant 10 : i32
      %c0_i32_53 = arith.constant 0 : i32
      %100 = tpu.memref_slice %arg3[%c10_i32_52, %c0_i32_53] : memref<16x256xf32, #tpu.memory_space<vmem>> -> memref<1x256xf32, #tpu.memory_space<vmem>>
      tpu.wait_dma2 semaphore(%arg4 : memref<!tpu.dma_semaphore, #tpu.memory_space<semaphore_mem>>) src(%99 : memref<1x256xf32, #tpu.memory_space<any>>) dst(%100 : memref<1x256xf32, #tpu.memory_space<vmem>>)
    } else {
    }
    %c11_i32_40 = arith.constant 11 : i32
    %84 = arith.cmpi sgt, %2, %c11_i32_40 : i32
    %85 = arith.extui %84 : i1 to i32
    %c0_i32_41 = arith.constant 0 : i32
    %86 = arith.cmpi ne, %85, %c0_i32_41 : i32
    scf.if %86 {
      %c0_i32_50 = arith.constant 0 : i32
      %c0_i32_51 = arith.constant 0 : i32
      %99 = tpu.memref_slice %arg2[%c0_i32_50, %c0_i32_51] : memref<512x256xf32, #tpu.memory_space<any>> -> memref<1x256xf32, #tpu.memory_space<any>>
      %c11_i32_52 = arith.constant 11 : i32
      %c0_i32_53 = arith.constant 0 : i32
      %100 = tpu.memref_slice %arg3[%c11_i32_52, %c0_i32_53] : memref<16x256xf32, #tpu.memory_space<vmem>> -> memref<1x256xf32, #tpu.memory_space<vmem>>
      tpu.wait_dma2 semaphore(%arg4 : memref<!tpu.dma_semaphore, #tpu.memory_space<semaphore_mem>>) src(%99 : memref<1x256xf32, #tpu.memory_space<any>>) dst(%100 : memref<1x256xf32, #tpu.memory_space<vmem>>)
    } else {
    }
    %c12_i32_42 = arith.constant 12 : i32
    %87 = arith.cmpi sgt, %2, %c12_i32_42 : i32
    %88 = arith.extui %87 : i1 to i32
    %c0_i32_43 = arith.constant 0 : i32
    %89 = arith.cmpi ne, %88, %c0_i32_43 : i32
    scf.if %89 {
      %c0_i32_50 = arith.constant 0 : i32
      %c0_i32_51 = arith.constant 0 : i32
      %99 = tpu.memref_slice %arg2[%c0_i32_50, %c0_i32_51] : memref<512x256xf32, #tpu.memory_space<any>> -> memref<1x256xf32, #tpu.memory_space<any>>
      %c12_i32_52 = arith.constant 12 : i32
      %c0_i32_53 = arith.constant 0 : i32
      %100 = tpu.memref_slice %arg3[%c12_i32_52, %c0_i32_53] : memref<16x256xf32, #tpu.memory_space<vmem>> -> memref<1x256xf32, #tpu.memory_space<vmem>>
      tpu.wait_dma2 semaphore(%arg4 : memref<!tpu.dma_semaphore, #tpu.memory_space<semaphore_mem>>) src(%99 : memref<1x256xf32, #tpu.memory_space<any>>) dst(%100 : memref<1x256xf32, #tpu.memory_space<vmem>>)
    } else {
    }
    %c13_i32_44 = arith.constant 13 : i32
    %90 = arith.cmpi sgt, %2, %c13_i32_44 : i32
    %91 = arith.extui %90 : i1 to i32
    %c0_i32_45 = arith.constant 0 : i32
    %92 = arith.cmpi ne, %91, %c0_i32_45 : i32
    scf.if %92 {
      %c0_i32_50 = arith.constant 0 : i32
      %c0_i32_51 = arith.constant 0 : i32
      %99 = tpu.memref_slice %arg2[%c0_i32_50, %c0_i32_51] : memref<512x256xf32, #tpu.memory_space<any>> -> memref<1x256xf32, #tpu.memory_space<any>>
      %c13_i32_52 = arith.constant 13 : i32
      %c0_i32_53 = arith.constant 0 : i32
      %100 = tpu.memref_slice %arg3[%c13_i32_52, %c0_i32_53] : memref<16x256xf32, #tpu.memory_space<vmem>> -> memref<1x256xf32, #tpu.memory_space<vmem>>
      tpu.wait_dma2 semaphore(%arg4 : memref<!tpu.dma_semaphore, #tpu.memory_space<semaphore_mem>>) src(%99 : memref<1x256xf32, #tpu.memory_space<any>>) dst(%100 : memref<1x256xf32, #tpu.memory_space<vmem>>)
    } else {
    }
    %c14_i32_46 = arith.constant 14 : i32
    %93 = arith.cmpi sgt, %2, %c14_i32_46 : i32
    %94 = arith.extui %93 : i1 to i32
    %c0_i32_47 = arith.constant 0 : i32
    %95 = arith.cmpi ne, %94, %c0_i32_47 : i32
    scf.if %95 {
      %c0_i32_50 = arith.constant 0 : i32
      %c0_i32_51 = arith.constant 0 : i32
      %99 = tpu.memref_slice %arg2[%c0_i32_50, %c0_i32_51] : memref<512x256xf32, #tpu.memory_space<any>> -> memref<1x256xf32, #tpu.memory_space<any>>
      %c14_i32_52 = arith.constant 14 : i32
      %c0_i32_53 = arith.constant 0 : i32
      %100 = tpu.memref_slice %arg3[%c14_i32_52, %c0_i32_53] : memref<16x256xf32, #tpu.memory_space<vmem>> -> memref<1x256xf32, #tpu.memory_space<vmem>>
      tpu.wait_dma2 semaphore(%arg4 : memref<!tpu.dma_semaphore, #tpu.memory_space<semaphore_mem>>) src(%99 : memref<1x256xf32, #tpu.memory_space<any>>) dst(%100 : memref<1x256xf32, #tpu.memory_space<vmem>>)
    } else {
    }
    %c15_i32_48 = arith.constant 15 : i32
    %96 = arith.cmpi sgt, %2, %c15_i32_48 : i32
    %97 = arith.extui %96 : i1 to i32
    %c0_i32_49 = arith.constant 0 : i32
    %98 = arith.cmpi ne, %97, %c0_i32_49 : i32
    scf.if %98 {
      %c0_i32_50 = arith.constant 0 : i32
      %c0_i32_51 = arith.constant 0 : i32
      %99 = tpu.memref_slice %arg2[%c0_i32_50, %c0_i32_51] : memref<512x256xf32, #tpu.memory_space<any>> -> memref<1x256xf32, #tpu.memory_space<any>>
      %c15_i32_52 = arith.constant 15 : i32
      %c0_i32_53 = arith.constant 0 : i32
      %100 = tpu.memref_slice %arg3[%c15_i32_52, %c0_i32_53] : memref<16x256xf32, #tpu.memory_space<vmem>> -> memref<1x256xf32, #tpu.memory_space<vmem>>
      tpu.wait_dma2 semaphore(%arg4 : memref<!tpu.dma_semaphore, #tpu.memory_space<semaphore_mem>>) src(%99 : memref<1x256xf32, #tpu.memory_space<any>>) dst(%100 : memref<1x256xf32, #tpu.memory_space<vmem>>)
    } else {
    }
    return
  }
  func.func @transform_1(%arg0: i32, %arg1: memref<16xi32, #tpu.memory_space<smem>>) -> (i32, i32) {
    %c0_i32 = arith.constant 0 : i32
    %c0_i32_0 = arith.constant 0 : i32
    return %arg0, %c0_i32 : i32, i32
  }
}

</mosaic_0001>

<llo_original>
// kernel: tpu_custom_call.1
$region0: #{tpu_custom_call.1}
  #allocation0 [shape = 'u32[]', space=smem, size = 0x4, offset = 0x4, fixed_abs, tag = 'smem constant byte address 0x4 - core index']
  #allocation1 [shape = 'u32[144,128]{1,0:T(1,128)}', space=vmem, size = 0x12000, scoped, tag = 'internal scratch']
  #allocation2 [shape = 's32[1]{0}', space=sflag, size = 0x4, scoped, tag = 'scratch operand']
  #allocation3 [shape = 's32[1]{0}', space=sflag, size = 0x4, scoped, tag = 'scoped memory for tpu_custom_call.1']
  #allocation4 [shape = 'u8[512]{0}', space=smem, size = 0x200, scoped, tag = 'prefetched SMEM operand 0']
  #allocation7 [shape = 's32[]', space=sflag, size = 0x4, offset = 0, fixed_abs, tag = 'sflag constant byte address 0x0 - dummy sync flag']
  #allocation8 [shape = 's32[]', space=sflag, size = 0x4, offset = 0, fixed_abs, tag = 'sflag constant byte address 0x0 - dummy sync flag']
  #allocation9 [shape = 's32[]', space=sflag, size = 0x4, offset = 0, fixed_abs, tag = 'sflag constant byte address 0x0 - dummy sync flag']
  #allocation10 [shape = 's32[]', space=sflag, size = 0x4, offset = 0, fixed_abs, tag = 'sflag constant byte address 0x0 - dummy sync flag']
  #allocation11 [shape = 's32[]', space=sflag, size = 0x4, offset = 0, fixed_abs, tag = 'sflag constant byte address 0x0 - dummy sync flag']
  #allocation12 [shape = 's32[]', space=sflag, size = 0x4, offset = 0, fixed_abs, tag = 'sflag constant byte address 0x0 - dummy sync flag']
  #allocation13 [shape = 's32[]', space=sflag, size = 0x4, offset = 0, fixed_abs, tag = 'sflag constant byte address 0x0 - dummy sync flag']
  #allocation14 [shape = 's32[]', space=sflag, size = 0x4, offset = 0, fixed_abs, tag = 'sflag constant byte address 0x0 - dummy sync flag']
  #allocation15 [shape = 's32[]', space=sflag, size = 0x4, offset = 0, fixed_abs, tag = 'sflag constant byte address 0x0 - dummy sync flag']
  #allocation16 [shape = 's32[]', space=sflag, size = 0x4, offset = 0, fixed_abs, tag = 'sflag constant byte address 0x0 - dummy sync flag']
  #allocation17 [shape = 's32[]', space=sflag, size = 0x4, offset = 0, fixed_abs, tag = 'sflag constant byte address 0x0 - dummy sync flag']
  #allocation18 [shape = 's32[]', space=sflag, size = 0x4, offset = 0, fixed_abs, tag = 'sflag constant byte address 0x0 - dummy sync flag']
  #allocation19 [shape = 's32[]', space=sflag, size = 0x4, offset = 0, fixed_abs, tag = 'sflag constant byte address 0x0 - dummy sync flag']
  #allocation20 [shape = 's32[]', space=sflag, size = 0x4, offset = 0, fixed_abs, tag = 'sflag constant byte address 0x0 - dummy sync flag']
  #allocation21 [shape = 's32[]', space=sflag, size = 0x4, offset = 0, fixed_abs, tag = 'sflag constant byte address 0x0 - dummy sync flag']
  #allocation22 [shape = 's32[]', space=sflag, size = 0x4, offset = 0, fixed_abs, tag = 'sflag constant byte address 0x0 - dummy sync flag']
  %s0 = inlined_call_operand.hbm [shape: s32[16], index: 0, kind: input, shape index: {}]
  %s1 = inlined_call_operand.hbm [shape: f32[512,256], index: 1, kind: input, shape index: {}]
  %s2 = inlined_call_operand.hbm [shape: f32[16,256], index: 2, kind: output, shape index: {}]
  %s3 = sld [smem:[#allocation0]]
  $region138: #{tpu_custom_call.1} parent=0
    _
  %s5 = ssub.s32 1, %s3
  %s6 = scalar_select 0, %s5, %s3
  %8 = dma.hbm_to_smem %s0, 16, [#allocation4], [#allocation3]
  %9 = dma.done [#allocation3], 16
  %10 = sfence
  $region1: #{tpu_custom_call.1} parent=0
    #allocation5 [shape = 'u8[16384]{0}', space=vmem, size = 0x4000, scoped, tag = 'output window, operand 0, single buffered']
    #allocation6 [shape = 's32[1]{0}', space=sflag, size = 0x4, scoped, tag = 'scoped memory for tpu_custom_call.1']
    %11 = vsyncpa [#allocation6], 0
    %s12 = smul.u32 0, 16
    %s13 = ssub.s32 11, %s12
    %p14 = scmp.lt.s32.totalorder %s13, 16
    %s15 = scalar_select %p14, %s13, 16
    %p16 = scmp.gt.s32.totalorder %s15, 0
    // Predicated region
    $region2: #{tpu_custom_call.1} parent=1 // pred_check
      %p17 = pneg %p16
    $region3: #{tpu_custom_call.1} parent=1 // pred_check_branch
      %19 = sbr.rel (%p17) target = $region5
    $region4: #{tpu_custom_call.1} parent=1 // pred_region
      %s20 = sld [smem:[#allocation4 + %s12]]
      %s21 = sshrl.u32 %s20, 3
      %s22 = sand.u32 %s20, 7
      %s23 = smul.u32 %s21, 16
      %s24 = sadd.s32 %s22, %s23
      %s25 = smul.addr %s24, 16
      %s26 = scalar_lea.hbm %s1, %s25
      %s28 = sshll.u32 [#allocation5], 4
      %s29 = int_to_ptr.vmem [resolvable:$true] %s28
      %31 = dma.hbm_to_vmem [thread:$0]  %s26, 32, %s29, [#allocation2], 128, 128, 1
    $region5: #{tpu_custom_call.1} parent=1 // pred_fallthru
      _
    %p32 = scmp.gt.s32.totalorder %s15, 1
    // Predicated region
    $region6: #{tpu_custom_call.1} parent=1 // pred_check
      %p33 = pneg %p32
    $region7: #{tpu_custom_call.1} parent=1 // pred_check_branch
      %35 = sbr.rel (%p33) target = $region9
    $region8: #{tpu_custom_call.1} parent=1 // pred_region
      %s36 = sadd.s32 %s12, 1
      %s37 = sld [smem:[#allocation4 + %s36]]
      %s38 = sshrl.u32 %s37, 3
      %s39 = sand.u32 %s37, 7
      %s40 = smul.u32 %s38, 16
      %s41 = sadd.s32 %s39, %s40
      %s42 = smul.addr %s41, 16
      %s43 = scalar_lea.hbm %s1, %s42
      %s44 = scalar_lea.vmem [#allocation5], 1
      %s46 = sshll.u32 %s44, 4
      %s47 = int_to_ptr.vmem [resolvable:$true] %s46
      %49 = dma.hbm_to_vmem [thread:$0]  %s43, 32, %s47, [#allocation2], 128, 128, 1
    $region9: #{tpu_custom_call.1} parent=1 // pred_fallthru
      _
    %p50 = scmp.gt.s32.totalorder %s15, 2
    // Predicated region
    $region10: #{tpu_custom_call.1} parent=1 // pred_check
      %p51 = pneg %p50
    $region11: #{tpu_custom_call.1} parent=1 // pred_check_branch
      %53 = sbr.rel (%p51) target = $region13
    $region12: #{tpu_custom_call.1} parent=1 // pred_region
      %s54 = sadd.s32 %s12, 2
      %s55 = sld [smem:[#allocation4 + %s54]]
      %s56 = sshrl.u32 %s55, 3
      %s57 = sand.u32 %s55, 7
      %s58 = smul.u32 %s56, 16
      %s59 = sadd.s32 %s57, %s58
      %s60 = smul.addr %s59, 16
      %s61 = scalar_lea.hbm %s1, %s60
      %s62 = scalar_lea.vmem [#allocation5], 2
      %s64 = sshll.u32 %s62, 4
      %s65 = int_to_ptr.vmem [resolvable:$true] %s64
      %67 = dma.hbm_to_vmem [thread:$0]  %s61, 32, %s65, [#allocation2], 128, 128, 1
    $region13: #{tpu_custom_call.1} parent=1 // pred_fallthru
      _
    %p68 = scmp.gt.s32.totalorder %s15, 3
    // Predicated region
    $region14: #{tpu_custom_call.1} parent=1 // pred_check
      %p69 = pneg %p68
    $region15: #{tpu_custom_call.1} parent=1 // pred_check_branch
      %71 = sbr.rel (%p69) target = $region17
    $region16: #{tpu_custom_call.1} parent=1 // pred_region
      %s72 = sadd.s32 %s12, 3
      %s73 = sld [smem:[#allocation4 + %s72]]
      %s74 = sshrl.u32 %s73, 3
      %s75 = sand.u32 %s73, 7
      %s76 = smul.u32 %s74, 16
      %s77 = sadd.s32 %s75, %s76
      %s78 = smul.addr %s77, 16
      %s79 = scalar_lea.hbm %s1, %s78
      %s80 = scalar_lea.vmem [#allocation5], 3
      %s82 = sshll.u32 %s80, 4
      %s83 = int_to_ptr.vmem [resolvable:$true] %s82
      %85 = dma.hbm_to_vmem [thread:$0]  %s79, 32, %s83, [#allocation2], 128, 128, 1
    $region17: #{tpu_custom_call.1} parent=1 // pred_fallthru
      _
    %p86 = scmp.gt.s32.totalorder %s15, 4
    // Predicated region
    $region18: #{tpu_custom_call.1} parent=1 // pred_check
      %p87 = pneg %p86
    $region19: #{tpu_custom_call.1} parent=1 // pred_check_branch
      %89 = sbr.rel (%p87) target = $region21
    $region20: #{tpu_custom_call.1} parent=1 // pred_region
      %s90 = sadd.s32 %s12, 4
      %s91 = sld [smem:[#allocation4 + %s90]]
      %s92 = sshrl.u32 %s91, 3
      %s93 = sand.u32 %s91, 7
      %s94 = smul.u32 %s92, 16
      %s95 = sadd.s32 %s93, %s94
      %s96 = smul.addr %s95, 16
      %s97 = scalar_lea.hbm %s1, %s96
      %s98 = scalar_lea.vmem [#allocation5], 4
      %s100 = sshll.u32 %s98, 4
      %s101 = int_to_ptr.vmem [resolvable:$true] %s100
      %103 = dma.hbm_to_vmem [thread:$0]  %s97, 32, %s101, [#allocation2], 128, 128, 1
    $region21: #{tpu_custom_call.1} parent=1 // pred_fallthru
      _
    %p104 = scmp.gt.s32.totalorder %s15, 5
    // Predicated region
    $region22: #{tpu_custom_call.1} parent=1 // pred_check
      %p105 = pneg %p104
    $region23: #{tpu_custom_call.1} parent=1 // pred_check_branch
      %107 = sbr.rel (%p105) target = $region25
    $region24: #{tpu_custom_call.1} parent=1 // pred_region
      %s108 = sadd.s32 %s12, 5
      %s109 = sld [smem:[#allocation4 + %s108]]
      %s110 = sshrl.u32 %s109, 3
      %s111 = sand.u32 %s109, 7
      %s112 = smul.u32 %s110, 16
      %s113 = sadd.s32 %s111, %s112
      %s114 = smul.addr %s113, 16
      %s115 = scalar_lea.hbm %s1, %s114
      %s116 = scalar_lea.vmem [#allocation5], 5
      %s118 = sshll.u32 %s116, 4
      %s119 = int_to_ptr.vmem [resolvable:$true] %s118
      %121 = dma.hbm_to_vmem [thread:$0]  %s115, 32, %s119, [#allocation2], 128, 128, 1
    $region25: #{tpu_custom_call.1} parent=1 // pred_fallthru
      _
    %p122 = scmp.gt.s32.totalorder %s15, 6
    // Predicated region
    $region26: #{tpu_custom_call.1} parent=1 // pred_check
      %p123 = pneg %p122
    $region27: #{tpu_custom_call.1} parent=1 // pred_check_branch
      %125 = sbr.rel (%p123) target = $region29
    $region28: #{tpu_custom_call.1} parent=1 // pred_region
      %s126 = sadd.s32 %s12, 6
      %s127 = sld [smem:[#allocation4 + %s126]]
      %s128 = sshrl.u32 %s127, 3
      %s129 = sand.u32 %s127, 7
      %s130 = smul.u32 %s128, 16
      %s131 = sadd.s32 %s129, %s130
      %s132 = smul.addr %s131, 16
      %s133 = scalar_lea.hbm %s1, %s132
      %s134 = scalar_lea.vmem [#allocation5], 6
      %s136 = sshll.u32 %s134, 4
      %s137 = int_to_ptr.vmem [resolvable:$true] %s136
      %139 = dma.hbm_to_vmem [thread:$0]  %s133, 32, %s137, [#allocation2], 128, 128, 1
    $region29: #{tpu_custom_call.1} parent=1 // pred_fallthru
      _
    %p140 = scmp.gt.s32.totalorder %s15, 7
    // Predicated region
    $region30: #{tpu_custom_call.1} parent=1 // pred_check
      %p141 = pneg %p140
    $region31: #{tpu_custom_call.1} parent=1 // pred_check_branch
      %143 = sbr.rel (%p141) target = $region33
    $region32: #{tpu_custom_call.1} parent=1 // pred_region
      %s144 = sadd.s32 %s12, 7
      %s145 = sld [smem:[#allocation4 + %s144]]
      %s146 = sshrl.u32 %s145, 3
      %s147 = sand.u32 %s145, 7
      %s148 = smul.u32 %s146, 16
      %s149 = sadd.s32 %s147, %s148
      %s150 = smul.addr %s149, 16
      %s151 = scalar_lea.hbm %s1, %s150
      %s152 = scalar_lea.vmem [#allocation5], 7
      %s154 = sshll.u32 %s152, 4
      %s155 = int_to_ptr.vmem [resolvable:$true] %s154
      %157 = dma.hbm_to_vmem [thread:$0]  %s151, 32, %s155, [#allocation2], 128, 128, 1
    $region33: #{tpu_custom_call.1} parent=1 // pred_fallthru
      _
    %p158 = scmp.gt.s32.totalorder %s15, 8
    // Predicated region
    $region34: #{tpu_custom_call.1} parent=1 // pred_check
      %p159 = pneg %p158
    $region35: #{tpu_custom_call.1} parent=1 // pred_check_branch
      %161 = sbr.rel (%p159) target = $region37
    $region36: #{tpu_custom_call.1} parent=1 // pred_region
      %s162 = sadd.s32 %s12, 8
      %s163 = sld [smem:[#allocation4 + %s162]]
      %s164 = sshrl.u32 %s163, 3
      %s165 = sand.u32 %s163, 7
      %s166 = smul.u32 %s164, 16
      %s167 = sadd.s32 %s165, %s166
      %s168 = smul.addr %s167, 16
      %s169 = scalar_lea.hbm %s1, %s168
      %s170 = scalar_lea.vmem [#allocation5], 16
      %s172 = sshll.u32 %s170, 4
      %s173 = int_to_ptr.vmem [resolvable:$true] %s172
      %175 = dma.hbm_to_vmem [thread:$0]  %s169, 32, %s173, [#allocation2], 128, 128, 1
    $region37: #{tpu_custom_call.1} parent=1 // pred_fallthru
      _
    %p176 = scmp.gt.s32.totalorder %s15, 9
    // Predicated region
    $region38: #{tpu_custom_call.1} parent=1 // pred_check
      %p177 = pneg %p176
    $region39: #{tpu_custom_call.1} parent=1 // pred_check_branch
      %179 = sbr.rel (%p177) target = $region41
    $region40: #{tpu_custom_call.1} parent=1 // pred_region
      %s180 = sadd.s32 %s12, 9
      %s181 = sld [smem:[#allocation4 + %s180]]
      %s182 = sshrl.u32 %s181, 3
      %s183 = sand.u32 %s181, 7
      %s184 = smul.u32 %s182, 16
      %s185 = sadd.s32 %s183, %s184
      %s186 = smul.addr %s185, 16
      %s187 = scalar_lea.hbm %s1, %s186
      %s188 = scalar_lea.vmem [#allocation5], 17
      %s190 = sshll.u32 %s188, 4
      %s191 = int_to_ptr.vmem [resolvable:$true] %s190
      %193 = dma.hbm_to_vmem [thread:$0]  %s187, 32, %s191, [#allocation2], 128, 128, 1
    $region41: #{tpu_custom_call.1} parent=1 // pred_fallthru
      _
    %p194 = scmp.gt.s32.totalorder %s15, 10
    // Predicated region
    $region42: #{tpu_custom_call.1} parent=1 // pred_check
      %p195 = pneg %p194
    $region43: #{tpu_custom_call.1} parent=1 // pred_check_branch
      %197 = sbr.rel (%p195) target = $region45
    $region44: #{tpu_custom_call.1} parent=1 // pred_region
      %s198 = sadd.s32 %s12, 10
      %s199 = sld [smem:[#allocation4 + %s198]]
      %s200 = sshrl.u32 %s199, 3
      %s201 = sand.u32 %s199, 7
      %s202 = smul.u32 %s200, 16
      %s203 = sadd.s32 %s201, %s202
      %s204 = smul.addr %s203, 16
      %s205 = scalar_lea.hbm %s1, %s204
      %s206 = scalar_lea.vmem [#allocation5], 18
      %s208 = sshll.u32 %s206, 4
      %s209 = int_to_ptr.vmem [resolvable:$true] %s208
      %211 = dma.hbm_to_vmem [thread:$0]  %s205, 32, %s209, [#allocation2], 128, 128, 1
    $region45: #{tpu_custom_call.1} parent=1 // pred_fallthru
      _
    %p212 = scmp.gt.s32.totalorder %s15, 11
    // Predicated region
    $region46: #{tpu_custom_call.1} parent=1 // pred_check
      %p213 = pneg %p212
    $region47: #{tpu_custom_call.1} parent=1 // pred_check_branch
      %215 = sbr.rel (%p213) target = $region49
    $region48: #{tpu_custom_call.1} parent=1 // pred_region
      %s216 = sadd.s32 %s12, 11
      %s217 = sld [smem:[#allocation4 + %s216]]
      %s218 = sshrl.u32 %s217, 3
      %s219 = sand.u32 %s217, 7
      %s220 = smul.u32 %s218, 16
      %s221 = sadd.s32 %s219, %s220
      %s222 = smul.addr %s221, 16
      %s223 = scalar_lea.hbm %s1, %s222
      %s224 = scalar_lea.vmem [#allocation5], 19
      %s226 = sshll.u32 %s224, 4
      %s227 = int_to_ptr.vmem [resolvable:$true] %s226
      %229 = dma.hbm_to_vmem [thread:$0]  %s223, 32, %s227, [#allocation2], 128, 128, 1
    $region49: #{tpu_custom_call.1} parent=1 // pred_fallthru
      _
    %p230 = scmp.gt.s32.totalorder %s15, 12
    // Predicated region
    $region50: #{tpu_custom_call.1} parent=1 // pred_check
      %p231 = pneg %p230
    $region51: #{tpu_custom_call.1} parent=1 // pred_check_branch
      %233 = sbr.rel (%p231) target = $region53
    $region52: #{tpu_custom_call.1} parent=1 // pred_region
      %s234 = sadd.s32 %s12, 12
      %s235 = sld [smem:[#allocation4 + %s234]]
      %s236 = sshrl.u32 %s235, 3
      %s237 = sand.u32 %s235, 7
      %s238 = smul.u32 %s236, 16
      %s239 = sadd.s32 %s237, %s238
      %s240 = smul.addr %s239, 16
      %s241 = scalar_lea.hbm %s1, %s240
      %s242 = scalar_lea.vmem [#allocation5], 20
      %s244 = sshll.u32 %s242, 4
      %s245 = int_to_ptr.vmem [resolvable:$true] %s244
      %247 = dma.hbm_to_vmem [thread:$0]  %s241, 32, %s245, [#allocation2], 128, 128, 1
    $region53: #{tpu_custom_call.1} parent=1 // pred_fallthru
      _
    %p248 = scmp.gt.s32.totalorder %s15, 13
    // Predicated region
    $region54: #{tpu_custom_call.1} parent=1 // pred_check
      %p249 = pneg %p248
    $region55: #{tpu_custom_call.1} parent=1 // pred_check_branch
      %251 = sbr.rel (%p249) target = $region57
    $region56: #{tpu_custom_call.1} parent=1 // pred_region
      %s252 = sadd.s32 %s12, 13
      %s253 = sld [smem:[#allocation4 + %s252]]
      %s254 = sshrl.u32 %s253, 3
      %s255 = sand.u32 %s253, 7
      %s256 = smul.u32 %s254, 16
      %s257 = sadd.s32 %s255, %s256
      %s258 = smul.addr %s257, 16
      %s259 = scalar_lea.hbm %s1, %s258
      %s260 = scalar_lea.vmem [#allocation5], 21
      %s262 = sshll.u32 %s260, 4
      %s263 = int_to_ptr.vmem [resolvable:$true] %s262
      %265 = dma.hbm_to_vmem [thread:$0]  %s259, 32, %s263, [#allocation2], 128, 128, 1
    $region57: #{tpu_custom_call.1} parent=1 // pred_fallthru
      _
    %p266 = scmp.gt.s32.totalorder %s15, 14
    // Predicated region
    $region58: #{tpu_custom_call.1} parent=1 // pred_check
      %p267 = pneg %p266
    $region59: #{tpu_custom_call.1} parent=1 // pred_check_branch
      %269 = sbr.rel (%p267) target = $region61
    $region60: #{tpu_custom_call.1} parent=1 // pred_region
      %s270 = sadd.s32 %s12, 14
      %s271 = sld [smem:[#allocation4 + %s270]]
      %s272 = sshrl.u32 %s271, 3
      %s273 = sand.u32 %s271, 7
      %s274 = smul.u32 %s272, 16
      %s275 = sadd.s32 %s273, %s274
      %s276 = smul.addr %s275, 16
      %s277 = scalar_lea.hbm %s1, %s276
      %s278 = scalar_lea.vmem [#allocation5], 22
      %s280 = sshll.u32 %s278, 4
      %s281 = int_to_ptr.vmem [resolvable:$true] %s280
      %283 = dma.hbm_to_vmem [thread:$0]  %s277, 32, %s281, [#allocation2], 128, 128, 1
    $region61: #{tpu_custom_call.1} parent=1 // pred_fallthru
      _
    %p284 = scmp.gt.s32.totalorder %s15, 15
    // Predicated region
    $region62: #{tpu_custom_call.1} parent=1 // pred_check
      %p285 = pneg %p284
    $region63: #{tpu_custom_call.1} parent=1 // pred_check_branch
      %287 = sbr.rel (%p285) target = $region65
    $region64: #{tpu_custom_call.1} parent=1 // pred_region
      %s288 = sadd.s32 %s12, 15
      %s289 = sld [smem:[#allocation4 + %s288]]
      %s290 = sshrl.u32 %s289, 3
      %s291 = sand.u32 %s289, 7
      %s292 = smul.u32 %s290, 16
      %s293 = sadd.s32 %s291, %s292
      %s294 = smul.addr %s293, 16
      %s295 = scalar_lea.hbm %s1, %s294
      %s296 = scalar_lea.vmem [#allocation5], 23
      %s298 = sshll.u32 %s296, 4
      %s299 = int_to_ptr.vmem [resolvable:$true] %s298
      %301 = dma.hbm_to_vmem [thread:$0]  %s295, 32, %s299, [#allocation2], 128, 128, 1
    $region65: #{tpu_custom_call.1} parent=1 // pred_fallthru
      _
    // Predicated region
    $region66: #{tpu_custom_call.1} parent=1 // pred_check
      %p302 = pneg %p16
    $region67: #{tpu_custom_call.1} parent=1 // pred_check_branch
      %304 = sbr.rel (%p302) target = $region69
    $region68: #{tpu_custom_call.1} parent=1 // pred_region
      %s305 = smul.u32 1, 2
      %s306 = sshll.u32 %s305, 4
      %307 = dma.done [#allocation2], %s306
    $region69: #{tpu_custom_call.1} parent=1 // pred_fallthru
      _
    // Predicated region
    $region70: #{tpu_custom_call.1} parent=1 // pred_check
      %p308 = pneg %p32
    $region71: #{tpu_custom_call.1} parent=1 // pred_check_branch
      %310 = sbr.rel (%p308) target = $region73
    $region72: #{tpu_custom_call.1} parent=1 // pred_region
      %s311 = smul.u32 1, 2
      %s312 = sshll.u32 %s311, 4
      %313 = dma.done [#allocation2], %s312
    $region73: #{tpu_custom_call.1} parent=1 // pred_fallthru
      _
    // Predicated region
    $region74: #{tpu_custom_call.1} parent=1 // pred_check
      %p314 = pneg %p50
    $region75: #{tpu_custom_call.1} parent=1 // pred_check_branch
      %316 = sbr.rel (%p314) target = $region77
    $region76: #{tpu_custom_call.1} parent=1 // pred_region
      %s317 = smul.u32 1, 2
      %s318 = sshll.u32 %s317, 4
      %319 = dma.done [#allocation2], %s318
    $region77: #{tpu_custom_call.1} parent=1 // pred_fallthru
      _
    // Predicated region
    $region78: #{tpu_custom_call.1} parent=1 // pred_check
      %p320 = pneg %p68
    $region79: #{tpu_custom_call.1} parent=1 // pred_check_branch
      %322 = sbr.rel (%p320) target = $region81
    $region80: #{tpu_custom_call.1} parent=1 // pred_region
      %s323 = smul.u32 1, 2
      %s324 = sshll.u32 %s323, 4
      %325 = dma.done [#allocation2], %s324
    $region81: #{tpu_custom_call.1} parent=1 // pred_fallthru
      _
    // Predicated region
    $region82: #{tpu_custom_call.1} parent=1 // pred_check
      %p326 = pneg %p86
    $region83: #{tpu_custom_call.1} parent=1 // pred_check_branch
      %328 = sbr.rel (%p326) target = $region85
    $region84: #{tpu_custom_call.1} parent=1 // pred_region
      %s329 = smul.u32 1, 2
      %s330 = sshll.u32 %s329, 4
      %331 = dma.done [#allocation2], %s330
    $region85: #{tpu_custom_call.1} parent=1 // pred_fallthru
      _
    // Predicated region
    $region86: #{tpu_custom_call.1} parent=1 // pred_check
      %p332 = pneg %p104
    $region87: #{tpu_custom_call.1} parent=1 // pred_check_branch
      %334 = sbr.rel (%p332) target = $region89
    $region88: #{tpu_custom_call.1} parent=1 // pred_region
      %s335 = smul.u32 1, 2
      %s336 = sshll.u32 %s335, 4
      %337 = dma.done [#allocation2], %s336
    $region89: #{tpu_custom_call.1} parent=1 // pred_fallthru
      _
    // Predicated region
    $region90: #{tpu_custom_call.1} parent=1 // pred_check
      %p338 = pneg %p122
    $region91: #{tpu_custom_call.1} parent=1 // pred_check_branch
      %340 = sbr.rel (%p338) target = $region93
    $region92: #{tpu_custom_call.1} parent=1 // pred_region
      %s341 = smul.u32 1, 2
      %s342 = sshll.u32 %s341, 4
      %343 = dma.done [#allocation2], %s342
    $region93: #{tpu_custom_call.1} parent=1 // pred_fallthru
      _
    // Predicated region
    $region94: #{tpu_custom_call.1} parent=1 // pred_check
      %p344 = pneg %p140
    $region95: #{tpu_custom_call.1} parent=1 // pred_check_branch
      %346 = sbr.rel (%p344) target = $region97
    $region96: #{tpu_custom_call.1} parent=1 // pred_region
      %s347 = smul.u32 1, 2
      %s348 = sshll.u32 %s347, 4
      %349 = dma.done [#allocation2], %s348
    $region97: #{tpu_custom_call.1} parent=1 // pred_fallthru
      _
    // Predicated region
    $region98: #{tpu_custom_call.1} parent=1 // pred_check
      %p350 = pneg %p158
    $region99: #{tpu_custom_call.1} parent=1 // pred_check_branch
      %352 = sbr.rel (%p350) target = $region101
    $region100: #{tpu_custom_call.1} parent=1 // pred_region
      %s353 = smul.u32 1, 2
      %s354 = sshll.u32 %s353, 4
      %355 = dma.done [#allocation2], %s354
    $region101: #{tpu_custom_call.1} parent=1 // pred_fallthru
      _
    // Predicated region
    $region102: #{tpu_custom_call.1} parent=1 // pred_check
      %p356 = pneg %p176
    $region103: #{tpu_custom_call.1} parent=1 // pred_check_branch
      %358 = sbr.rel (%p356) target = $region105
    $region104: #{tpu_custom_call.1} parent=1 // pred_region
      %s359 = smul.u32 1, 2
      %s360 = sshll.u32 %s359, 4
      %361 = dma.done [#allocation2], %s360
    $region105: #{tpu_custom_call.1} parent=1 // pred_fallthru
      _
    // Predicated region
    $region106: #{tpu_custom_call.1} parent=1 // pred_check
      %p362 = pneg %p194
    $region107: #{tpu_custom_call.1} parent=1 // pred_check_branch
      %364 = sbr.rel (%p362) target = $region109
    $region108: #{tpu_custom_call.1} parent=1 // pred_region
      %s365 = smul.u32 1, 2
      %s366 = sshll.u32 %s365, 4
      %367 = dma.done [#allocation2], %s366
    $region109: #{tpu_custom_call.1} parent=1 // pred_fallthru
      _
    // Predicated region
    $region110: #{tpu_custom_call.1} parent=1 // pred_check
      %p368 = pneg %p212
    $region111: #{tpu_custom_call.1} parent=1 // pred_check_branch
      %370 = sbr.rel (%p368) target = $region113
    $region112: #{tpu_custom_call.1} parent=1 // pred_region
      %s371 = smul.u32 1, 2
      %s372 = sshll.u32 %s371, 4
      %373 = dma.done [#allocation2], %s372
    $region113: #{tpu_custom_call.1} parent=1 // pred_fallthru
      _
    // Predicated region
    $region114: #{tpu_custom_call.1} parent=1 // pred_check
      %p374 = pneg %p230
    $region115: #{tpu_custom_call.1} parent=1 // pred_check_branch
      %376 = sbr.rel (%p374) target = $region117
    $region116: #{tpu_custom_call.1} parent=1 // pred_region
      %s377 = smul.u32 1, 2
      %s378 = sshll.u32 %s377, 4
      %379 = dma.done [#allocation2], %s378
    $region117: #{tpu_custom_call.1} parent=1 // pred_fallthru
      _
    // Predicated region
    $region118: #{tpu_custom_call.1} parent=1 // pred_check
      %p380 = pneg %p248
    $region119: #{tpu_custom_call.1} parent=1 // pred_check_branch
      %382 = sbr.rel (%p380) target = $region121
    $region120: #{tpu_custom_call.1} parent=1 // pred_region
      %s383 = smul.u32 1, 2
      %s384 = sshll.u32 %s383, 4
      %385 = dma.done [#allocation2], %s384
    $region121: #{tpu_custom_call.1} parent=1 // pred_fallthru
      _
    // Predicated region
    $region122: #{tpu_custom_call.1} parent=1 // pred_check
      %p386 = pneg %p266
    $region123: #{tpu_custom_call.1} parent=1 // pred_check_branch
      %388 = sbr.rel (%p386) target = $region125
    $region124: #{tpu_custom_call.1} parent=1 // pred_region
      %s389 = smul.u32 1, 2
      %s390 = sshll.u32 %s389, 4
      %391 = dma.done [#allocation2], %s390
    $region125: #{tpu_custom_call.1} parent=1 // pred_fallthru
      _
    // Predicated region
    $region126: #{tpu_custom_call.1} parent=1 // pred_check
      %p392 = pneg %p284
    $region127: #{tpu_custom_call.1} parent=1 // pred_check_branch
      %394 = sbr.rel (%p392) target = $region129
    $region128: #{tpu_custom_call.1} parent=1 // pred_region
      %s395 = smul.u32 1, 2
      %s396 = sshll.u32 %s395, 4
      %397 = dma.done [#allocation2], %s396
    $region129: #{tpu_custom_call.1} parent=1 // pred_fallthru
      _
    // Predicated region
    $region130: #{tpu_custom_call.1} parent=1 // pred_check
      _
    $region131: #{tpu_custom_call.1} parent=1 // pred_check_branch
      %399 = sbr.rel (0) target = $region133
    $region132: #{tpu_custom_call.1} parent=1 // pred_region
      %s401 = ssub.s32 512, 512
      %402 = vsyncadd [#allocation6], %s401
      %s403 = sshll.u32 [#allocation5], 4
      %s404 = int_to_ptr.vmem [resolvable:$true] %s403
      %409 = dma.vmem_to_hbm [thread:$0]  %s404, 512, %s2, [#allocation6], 256, 256, 16
    $region133: #{tpu_custom_call.1} parent=1 // pred_fallthru
      _
    // Predicated region
    $region134: #{tpu_custom_call.1} parent=1 // pred_check
      _
    $region135: #{tpu_custom_call.1} parent=1 // pred_check_branch
      %411 = sbr.rel (0) target = $region137
    $region136: #{tpu_custom_call.1} parent=1 // pred_region
      %412 = dma.done [#allocation6], 512
    $region137: #{tpu_custom_call.1} parent=1 // pred_fallthru
      _
    %413 = vsyncpa [#allocation6], 1
  %414 = vsyncmov [#allocation2]
  %s415 = vpop.sfrf %414
  %p416 = scmp.eq.s32.totalorder %s415, 0
  %p417 = pneg %p416
  %419 = shalt.err (%p417)

</llo_original>
